<compile_context>
chip_gen: v7x
topology: tpu7x:2x2x1
jax: 0.10.0
libtpu: 0.0.40
codegen_flags: <defaults>
</compile_context>

<pallas_src>
import jax
import jax.numpy as jnp
from jax.experimental import pallas as pl
from jax.experimental.pallas import tpu as pltpu

_LANE = 128
_SUBLANE = 8
_WEIGHT_VMEM_BUDGET = 20 * 1024 * 1024  # cap on double-buffered weight blocks


def _round_up(x, m):
    return ((x + m - 1) // m) * m


def _qkv_kernel(q_ref, k_ref, v_ref, wq_ref, wk_ref, wv_ref,
                qo_ref, ko_ref, vo_ref,
                q_acc, k_acc, v_acc):
    """One (tm, n_pad) output row-block per i; grid axis 1 is the K reduction."""
    @pl.when(pl.program_id(1) == 0)
    def _init():
        q_acc[...] = jnp.zeros_like(q_acc)
        k_acc[...] = jnp.zeros_like(k_acc)
        v_acc[...] = jnp.zeros_like(v_acc)

    cdt = wq_ref.dtype  # compute dtype (bf16 by default); cast fused in-kernel
    q_acc[...] += jnp.dot(q_ref[...].astype(cdt), wq_ref[...],
                          preferred_element_type=jnp.float32)
    k_acc[...] += jnp.dot(k_ref[...].astype(cdt), wk_ref[...],
                          preferred_element_type=jnp.float32)
    v_acc[...] += jnp.dot(v_ref[...].astype(cdt), wv_ref[...],
                          preferred_element_type=jnp.float32)

    @pl.when(pl.program_id(1) == pl.num_programs(1) - 1)
    def _finalize():
        qo_ref[...] = q_acc[...].astype(qo_ref.dtype)
        ko_ref[...] = k_acc[...].astype(ko_ref.dtype)
        vo_ref[...] = v_acc[...].astype(vo_ref.dtype)


def prepare_qkv_weights(w_q, w_k, w_v, *, tk=1024, compute_dtype=jnp.bfloat16):
    """One-time weight prep — call OUTSIDE the hot path.

    PyTorch nn.Linear weights are (out_features, in_features).  Transpose to
    (model_d, out_d), zero-pad out_d to its own lane-dense width (multiple of
    128), zero-pad model_d to a multiple of the chosen K tile, and cast to
    `compute_dtype` (bf16 by default: native MXU dtype + half the HBM traffic).
    Pass compute_dtype=None to keep the original (f32) weight dtype.
    """
    k_d, model_d = w_q.shape
    v_d = w_v.shape[0]
    assert w_k.shape == (k_d, model_d), "w_k shape mismatch"
    assert w_v.shape == (v_d, model_d), "w_v shape mismatch"

    nq_pad = _round_up(k_d, _LANE)
    nv_pad = _round_up(v_d, _LANE)

    w_dtype = compute_dtype if compute_dtype is not None else w_q.dtype
    w_itemsize = jnp.dtype(w_dtype).itemsize

    # K tile: as large as possible (fewer grid steps; weights DMA'd once when
    # nk == 1) but bounded so double-buffered weight blocks stay inside VMEM
    # (v7x only has 64 MiB physical).  Always a multiple of 128 when tiling.
    per_128_bytes = 2 * _LANE * (2 * nq_pad + nv_pad) * w_itemsize
    tk_budget = max(_LANE, (_WEIGHT_VMEM_BUDGET // per_128_bytes) * _LANE)
    tk_req = max(_LANE, (min(tk, tk_budget) // _LANE) * _LANE)

    if model_d <= tk_req:
        tk_eff = model_d       # single K step; full-dim block is always legal
        k_pad = model_d
    else:
        tk_eff = tk_req        # multiple of 128 -> legal block dim
        k_pad = _round_up(model_d, tk_eff)

    def _prep(w, n_pad):
        wt = w.T  # (model_d, out_d)
        wt = jnp.pad(wt, ((0, k_pad - model_d), (0, n_pad - w.shape[0])))
        return wt.astype(w_dtype)

    return dict(
        wq=_prep(w_q, nq_pad), wk=_prep(w_k, nq_pad), wv=_prep(w_v, nv_pad),
        model_d=model_d, k_d=k_d, v_d=v_d,
        nq_pad=nq_pad, nv_pad=nv_pad, k_pad=k_pad, tk=tk_eff,
        compute_dtype=w_dtype,
    )


def qkv_project(q, k, v, prepared, *, tm=256, force_pallas=False):
    """Hot-path projection.  q/k/v: (..., model_d). Returns (q1, k1, v1)."""
    model_d = prepared["model_d"]
    k_d, v_d = prepared["k_d"], prepared["v_d"]
    nq_pad, nv_pad = prepared["nq_pad"], prepared["nv_pad"]
    k_pad, tk = prepared["k_pad"], prepared["tk"]
    wq, wk, wv = prepared["wq"], prepared["wk"], prepared["wv"]

    assert q.shape[-1] == model_d and k.shape == q.shape and v.shape == q.shape
    lead = q.shape[:-1]
    M = 1
    for s in lead:
        M *= s

    # Small-problem fallback: per-step pipeline overhead and masked vregs
    # dominate below ~a vreg of rows / lanes — let XLA fuse it instead.
    if not force_pallas and (M < _LANE or max(k_d, v_d) < _LANE):
        def _proj(x, w, out_d):
            xc = x.reshape(M, model_d).astype(w.dtype)
            y = jnp.dot(xc, w[:model_d, :out_d],
                        preferred_element_type=jnp.float32)
            return y.astype(x.dtype).reshape(*lead, out_d)
        return (_proj(q, wq, k_d), _proj(k, wk, k_d), _proj(v, wv, v_d))

    # Adaptive M tile.  No M padding pass: pl.cdiv grid + dropped edge writes.
    tm_eff = min(tm, _round_up(M, _SUBLANE))
    nm = pl.cdiv(M, tm_eff)
    nk = k_pad // tk

    def _prep_act(x):
        x2 = x.reshape(M, model_d)
        if k_pad != model_d:
            # Zero-pad the reduction dim only when K is tiled unevenly
            # (zeros contribute nothing to the reduction).
            x2 = jnp.pad(x2, ((0, 0), (0, k_pad - model_d)))
        return x2

    q2, k2, v2 = _prep_act(q), _prep_act(k), _prep_act(v)

    act_spec = pl.BlockSpec((tm_eff, tk), lambda i, l: (i, l))
    wq_spec = pl.BlockSpec((tk, nq_pad), lambda i, l: (l, 0))
    wv_spec = pl.BlockSpec((tk, nv_pad), lambda i, l: (l, 0))
    oq_spec = pl.BlockSpec((tm_eff, nq_pad), lambda i, l: (i, 0))
    ov_spec = pl.BlockSpec((tm_eff, nv_pad), lambda i, l: (i, 0))

    out_shape = (
        jax.ShapeDtypeStruct((M, nq_pad), q.dtype),
        jax.ShapeDtypeStruct((M, nq_pad), k.dtype),
        jax.ShapeDtypeStruct((M, nv_pad), v.dtype),
    )

    w_b = jnp.dtype(wq.dtype).itemsize
    act_bytes = (jnp.dtype(q2.dtype).itemsize + jnp.dtype(k2.dtype).itemsize
                 + jnp.dtype(v2.dtype).itemsize)
    out_bytes = (nq_pad * jnp.dtype(q.dtype).itemsize
                 + nq_pad * jnp.dtype(k.dtype).itemsize
                 + nv_pad * jnp.dtype(v.dtype).itemsize)

    # Conservative VMEM estimate (double-buffered inputs/weights/outputs +
    # f32 accumulators) -> raise the scoped limit, capped below v7x physical.
    est = (2 * tm_eff * tk * act_bytes
           + 2 * tk * (2 * nq_pad + nv_pad) * w_b
           + 2 * tm_eff * out_bytes
           + 4 * tm_eff * (2 * nq_pad + nv_pad))
    vmem_limit = int(min(64 * 1024 * 1024,
                         max(32 * 1024 * 1024, int(est * 1.4) + (2 << 20))))

    w_reads = 1 if nk == 1 else nm
    cost = pl.CostEstimate(
        flops=2 * M * k_pad * (2 * nq_pad + nv_pad),
        transcendentals=0,
        bytes_accessed=(M * k_pad * act_bytes
                        + w_reads * k_pad * (2 * nq_pad + nv_pad) * w_b
                        + M * out_bytes),
    )

    q1p, k1p, v1p = pl.pallas_call(
        _qkv_kernel,
        grid_spec=pltpu.PrefetchScalarGridSpec(
            num_scalar_prefetch=0,
            grid=(nm, nk),
            in_specs=[act_spec, act_spec, act_spec, wq_spec, wq_spec, wv_spec],
            out_specs=[oq_spec, oq_spec, ov_spec],
            scratch_shapes=[pltpu.VMEM((tm_eff, nq_pad), jnp.float32),
                            pltpu.VMEM((tm_eff, nq_pad), jnp.float32),
                            pltpu.VMEM((tm_eff, nv_pad), jnp.float32)]),
        out_shape=out_shape,
        compiler_params=pltpu.CompilerParams(
            dimension_semantics=("parallel", "arbitrary"),
            vmem_limit_bytes=vmem_limit),
        cost_estimate=cost,
    )(q2, k2, v2, wq, wk, wv)

    def _post(y, out_d, n_p):
        if out_d != n_p:           # static check -> no-op when lane-aligned
            y = y[:, :out_d]
        return y.reshape(*lead, out_d)

    return (_post(q1p, k_d, nq_pad),
            _post(k1p, k_d, nq_pad),
            _post(v1p, v_d, nv_pad))


def qkv_generator_single(q, k, v, w_q, w_k, w_v, *, tm=256, tk=1024,
                         compute_dtype=jnp.bfloat16, force_pallas=False):
    """Drop-in convenience wrapper (prepares weights every call).
    Prefer prepare_qkv_weights(...) once + qkv_project(...) in hot loops."""
    prepared = prepare_qkv_weights(w_q, w_k, w_v, tk=tk,
                                   compute_dtype=compute_dtype)
    return qkv_project(q, k, v, prepared, tm=tm, force_pallas=force_pallas)


if __name__ == "__main__":
    key = jax.random.PRNGKey(0)

    # ---- Test 1: tiny module-consistent shapes, f32 compute, tight check ---
    batch, seq = 2, 8
    model_d, k_d, v_d = 32, 16, 16
    kq, kk, kv, kwq, kwk, kwv, k2, k3 = jax.random.split(key, 8)
    q = jax.random.normal(kq, (batch, seq, model_d), jnp.float32)
    k = jax.random.normal(kk, (batch, seq, model_d), jnp.float32)
    v = jax.random.normal(kv, (batch, seq, model_d), jnp.float32)
    bound = 1.0 / (model_d ** 0.5)
    w_q = jax.random.uniform(kwq, (k_d, model_d), jnp.float32, -bound, bound)
    w_k = jax.random.uniform(kwk, (k_d, model_d), jnp.float32, -bound, bound)
    w_v = jax.random.uniform(kwv, (v_d, model_d), jnp.float32, -bound, bound)

    prepared = prepare_qkv_weights(w_q, w_k, w_v, compute_dtype=None)  # f32
    q1, k1, v1 = qkv_project(q, k, v, prepared, force_pallas=True)
    jax.block_until_ready((q1, k1, v1))

    assert q1.shape == (batch, seq, k_d)
    assert k1.shape == (batch, seq, k_d)
    assert v1.shape == (batch, seq, v_d)
    assert jnp.allclose(q1, q @ w_q.T, atol=1e-5, rtol=1e-5)
    assert jnp.allclose(k1, k @ w_k.T, atol=1e-5, rtol=1e-5)
    assert jnp.allclose(v1, v @ w_v.T, atol=1e-5, rtol=1e-5)

    # Dispatch check: tiny shapes take the XLA fallback when not forced.
    qf, kf, vf = qkv_project(q, k, v, prepared)
    assert jnp.allclose(qf, q1, atol=1e-5, rtol=1e-5)

    # ---- Test 2: ragged M, K tiling + K padding, N padding/slice (f32) -----
    b2, s2, md2, kd2, vd2 = 2, 200, 320, 192, 160   # M=400 -> ragged edge tile
    kq2, kk2, kv2, kwq2, kwk2, kwv2 = jax.random.split(k2, 6)
    q_b = jax.random.normal(kq2, (b2, s2, md2), jnp.float32)
    k_b = jax.random.normal(kk2, (b2, s2, md2), jnp.float32)
    v_b = jax.random.normal(kv2, (b2, s2, md2), jnp.float32)
    bnd2 = 1.0 / (md2 ** 0.5)
    w_q2 = jax.random.uniform(kwq2, (kd2, md2), jnp.float32, -bnd2, bnd2)
    w_k2 = jax.random.uniform(kwk2, (kd2, md2), jnp.float32, -bnd2, bnd2)
    w_v2 = jax.random.uniform(kwv2, (vd2, md2), jnp.float32, -bnd2, bnd2)

    prepared2 = prepare_qkv_weights(w_q2, w_k2, w_v2, tk=128,
                                    compute_dtype=None)  # force K tiling
    q1b, k1b, v1b = qkv_project(q_b, k_b, v_b, prepared2, force_pallas=True)
    jax.block_until_ready((q1b, k1b, v1b))

    assert q1b.shape == (b2, s2, kd2)
    assert v1b.shape == (b2, s2, vd2)
    assert jnp.allclose(q1b, q_b @ w_q2.T, atol=1e-4, rtol=1e-4)
    assert jnp.allclose(k1b, k_b @ w_k2.T, atol=1e-4, rtol=1e-4)
    assert jnp.allclose(v1b, v_b @ w_v2.T, atol=1e-4, rtol=1e-4)

    # ---- Test 3: default bf16 compute path, lane-aligned outputs -----------
    b3, s3, md3, kd3, vd3 = 2, 256, 512, 128, 128
    kq3, kk3, kv3, kwq3, kwk3, kwv3 = jax.random.split(k3, 6)
    q_c = jax.random.normal(kq3, (b3, s3, md3), jnp.float32)
    k_c = jax.random.normal(kk3, (b3, s3, md3), jnp.float32)
    v_c = jax.random.normal(kv3, (b3, s3, md3), jnp.float32)
    bnd3 = 1.0 / (md3 ** 0.5)
    w_q3 = jax.random.uniform(kwq3, (kd3, md3), jnp.float32, -bnd3, bnd3)
    w_k3 = jax.random.uniform(kwk3, (kd3, md3), jnp.float32, -bnd3, bnd3)
    w_v3 = jax.random.uniform(kwv3, (vd3, md3), jnp.float32, -bnd3, bnd3)

    prepared3 = prepare_qkv_weights(w_q3, w_k3, w_v3)   # bf16 default
    q1c, k1c, v1c = qkv_project(q_c, k_c, v_c, prepared3, force_pallas=True)
    jax.block_until_ready((q1c, k1c, v1c))

    assert q1c.shape == (b3, s3, kd3) and v1c.shape == (b3, s3, vd3)
    assert jnp.allclose(q1c, q_c @ w_q3.T, atol=3e-2, rtol=3e-2)
    assert jnp.allclose(k1c, k_c @ w_k3.T, atol=3e-2, rtol=3e-2)
    assert jnp.allclose(v1c, v_c @ w_v3.T, atol=3e-2, rtol=3e-2)

    print("KERNEL_OK")
</pallas_src>

<mosaic_0001>
module attributes {stable_mosaic.version = 11 : i64} {
  func.func @_qkv_kernel(%arg0: i32, %arg1: i32, %arg2: memref<16x32xf32, #tpu.memory_space<vmem>>, %arg3: memref<16x32xf32, #tpu.memory_space<vmem>>, %arg4: memref<16x32xf32, #tpu.memory_space<vmem>>, %arg5: memref<32x128xf32, #tpu.memory_space<vmem>>, %arg6: memref<32x128xf32, #tpu.memory_space<vmem>>, %arg7: memref<32x128xf32, #tpu.memory_space<vmem>>, %arg8: memref<16x128xf32, #tpu.memory_space<vmem>>, %arg9: memref<16x128xf32, #tpu.memory_space<vmem>>, %arg10: memref<16x128xf32, #tpu.memory_space<vmem>>, %arg11: memref<16x128xf32, #tpu.memory_space<vmem>>, %arg12: memref<16x128xf32, #tpu.memory_space<vmem>>, %arg13: memref<16x128xf32, #tpu.memory_space<vmem>>) attributes {dimension_semantics = [#tpu.dimension_semantics<parallel>, #tpu.dimension_semantics<arbitrary>], iteration_bounds = array<i64: 1, 1>, scalar_prefetch = 0 : i64, scratch_operands = 3 : i64, tpu.core_type = #tpu.core_type<tc>, window_params = [{transform_indices = @transform_0, window_bounds = array<i64: 16, 32>}, {transform_indices = @transform_1, window_bounds = array<i64: 16, 32>}, {transform_indices = @transform_2, window_bounds = array<i64: 16, 32>}, {transform_indices = @transform_3, window_bounds = array<i64: 32, 128>}, {transform_indices = @transform_4, window_bounds = array<i64: 32, 128>}, {transform_indices = @transform_5, window_bounds = array<i64: 32, 128>}, {transform_indices = @transform_6, window_bounds = array<i64: 16, 128>}, {transform_indices = @transform_7, window_bounds = array<i64: 16, 128>}, {transform_indices = @transform_8, window_bounds = array<i64: 16, 128>}]} {
    %c0_i32 = arith.constant 0 : i32
    %0 = arith.cmpi eq, %arg1, %c0_i32 : i32
    %1 = arith.extui %0 : i1 to i32
    %c0_i32_0 = arith.constant 0 : i32
    %2 = arith.cmpi ne, %1, %c0_i32_0 : i32
    scf.if %2 {
      %cst_28 = arith.constant 0.000000e+00 : f32
      %24 = vector.broadcast %cst_28 : f32 to vector<16x128xf32>
      %c0_29 = arith.constant 0 : index
      %c0_30 = arith.constant 0 : index
      %25 = vector.load %arg11[%c0_29, %c0_30] : memref<16x128xf32, #tpu.memory_space<vmem>>, vector<16x128xf32>
      tpu.vector_store %arg11[%c0_29, %c0_30], %24 {strides = array<i32>} : memref<16x128xf32, #tpu.memory_space<vmem>>, vector<16x128xf32>,
      %cst_31 = arith.constant 0.000000e+00 : f32
      %26 = vector.broadcast %cst_31 : f32 to vector<16x128xf32>
      %c0_32 = arith.constant 0 : index
      %c0_33 = arith.constant 0 : index
      %27 = vector.load %arg12[%c0_32, %c0_33] : memref<16x128xf32, #tpu.memory_space<vmem>>, vector<16x128xf32>
      tpu.vector_store %arg12[%c0_32, %c0_33], %26 {strides = array<i32>} : memref<16x128xf32, #tpu.memory_space<vmem>>, vector<16x128xf32>,
      %cst_34 = arith.constant 0.000000e+00 : f32
      %28 = vector.broadcast %cst_34 : f32 to vector<16x128xf32>
      %c0_35 = arith.constant 0 : index
      %c0_36 = arith.constant 0 : index
      %29 = vector.load %arg13[%c0_35, %c0_36] : memref<16x128xf32, #tpu.memory_space<vmem>>, vector<16x128xf32>
      tpu.vector_store %arg13[%c0_35, %c0_36], %28 {strides = array<i32>} : memref<16x128xf32, #tpu.memory_space<vmem>>, vector<16x128xf32>,
    } else {
    }
    %c0 = arith.constant 0 : index
    %c0_1 = arith.constant 0 : index
    %3 = vector.load %arg11[%c0, %c0_1] : memref<16x128xf32, #tpu.memory_space<vmem>>, vector<16x128xf32>
    %c0_2 = arith.constant 0 : index
    %c0_3 = arith.constant 0 : index
    %4 = vector.load %arg2[%c0_2, %c0_3] : memref<16x32xf32, #tpu.memory_space<vmem>>, vector<16x32xf32>
    %c0_4 = arith.constant 0 : index
    %c0_5 = arith.constant 0 : index
    %5 = vector.load %arg5[%c0_4, %c0_5] : memref<32x128xf32, #tpu.memory_space<vmem>>, vector<32x128xf32>
    %cst = arith.constant dense<0.000000e+00> : vector<16x128xf32>
    %6 = tpu.matmul %4, %5, %cst {dimension_numbers = #tpu.dot_dimension_numbers<[1], [0], [0], [1], [0, 0, 1, 1], [], []>} : vector<16x32xf32>, vector<32x128xf32>, vector<16x128xf32> -> vector<16x128xf32>
    %7 = arith.addf %3, %6 : vector<16x128xf32>
    %c0_6 = arith.constant 0 : index
    %c0_7 = arith.constant 0 : index
    %8 = vector.load %arg11[%c0_6, %c0_7] : memref<16x128xf32, #tpu.memory_space<vmem>>, vector<16x128xf32>
    tpu.vector_store %arg11[%c0_6, %c0_7], %7 {strides = array<i32>} : memref<16x128xf32, #tpu.memory_space<vmem>>, vector<16x128xf32>,
    %c0_8 = arith.constant 0 : index
    %c0_9 = arith.constant 0 : index
    %9 = vector.load %arg12[%c0_8, %c0_9] : memref<16x128xf32, #tpu.memory_space<vmem>>, vector<16x128xf32>
    %c0_10 = arith.constant 0 : index
    %c0_11 = arith.constant 0 : index
    %10 = vector.load %arg3[%c0_10, %c0_11] : memref<16x32xf32, #tpu.memory_space<vmem>>, vector<16x32xf32>
    %c0_12 = arith.constant 0 : index
    %c0_13 = arith.constant 0 : index
    %11 = vector.load %arg6[%c0_12, %c0_13] : memref<32x128xf32, #tpu.memory_space<vmem>>, vector<32x128xf32>
    %cst_14 = arith.constant dense<0.000000e+00> : vector<16x128xf32>
    %12 = tpu.matmul %10, %11, %cst_14 {dimension_numbers = #tpu.dot_dimension_numbers<[1], [0], [0], [1], [0, 0, 1, 1], [], []>} : vector<16x32xf32>, vector<32x128xf32>, vector<16x128xf32> -> vector<16x128xf32>
    %13 = arith.addf %9, %12 : vector<16x128xf32>
    %c0_15 = arith.constant 0 : index
    %c0_16 = arith.constant 0 : index
    %14 = vector.load %arg12[%c0_15, %c0_16] : memref<16x128xf32, #tpu.memory_space<vmem>>, vector<16x128xf32>
    tpu.vector_store %arg12[%c0_15, %c0_16], %13 {strides = array<i32>} : memref<16x128xf32, #tpu.memory_space<vmem>>, vector<16x128xf32>,
    %c0_17 = arith.constant 0 : index
    %c0_18 = arith.constant 0 : index
    %15 = vector.load %arg13[%c0_17, %c0_18] : memref<16x128xf32, #tpu.memory_space<vmem>>, vector<16x128xf32>
    %c0_19 = arith.constant 0 : index
    %c0_20 = arith.constant 0 : index
    %16 = vector.load %arg4[%c0_19, %c0_20] : memref<16x32xf32, #tpu.memory_space<vmem>>, vector<16x32xf32>
    %c0_21 = arith.constant 0 : index
    %c0_22 = arith.constant 0 : index
    %17 = vector.load %arg7[%c0_21, %c0_22] : memref<32x128xf32, #tpu.memory_space<vmem>>, vector<32x128xf32>
    %cst_23 = arith.constant dense<0.000000e+00> : vector<16x128xf32>
    %18 = tpu.matmul %16, %17, %cst_23 {dimension_numbers = #tpu.dot_dimension_numbers<[1], [0], [0], [1], [0, 0, 1, 1], [], []>} : vector<16x32xf32>, vector<32x128xf32>, vector<16x128xf32> -> vector<16x128xf32>
    %19 = arith.addf %15, %18 : vector<16x128xf32>
    %c0_24 = arith.constant 0 : index
    %c0_25 = arith.constant 0 : index
    %20 = vector.load %arg13[%c0_24, %c0_25] : memref<16x128xf32, #tpu.memory_space<vmem>>, vector<16x128xf32>
    tpu.vector_store %arg13[%c0_24, %c0_25], %19 {strides = array<i32>} : memref<16x128xf32, #tpu.memory_space<vmem>>, vector<16x128xf32>,
    %c0_i32_26 = arith.constant 0 : i32
    %21 = arith.cmpi eq, %arg1, %c0_i32_26 : i32
    %22 = arith.extui %21 : i1 to i32
    %c0_i32_27 = arith.constant 0 : i32
    %23 = arith.cmpi ne, %22, %c0_i32_27 : i32
    scf.if %23 {
      %c0_28 = arith.constant 0 : index
      %c0_29 = arith.constant 0 : index
      %24 = vector.load %arg11[%c0_28, %c0_29] : memref<16x128xf32, #tpu.memory_space<vmem>>, vector<16x128xf32>
      %c0_30 = arith.constant 0 : index
      %c0_31 = arith.constant 0 : index
      %25 = vector.load %arg8[%c0_30, %c0_31] : memref<16x128xf32, #tpu.memory_space<vmem>>, vector<16x128xf32>
      tpu.vector_store %arg8[%c0_30, %c0_31], %24 {strides = array<i32>} : memref<16x128xf32, #tpu.memory_space<vmem>>, vector<16x128xf32>,
      %c0_32 = arith.constant 0 : index
      %c0_33 = arith.constant 0 : index
      %26 = vector.load %arg12[%c0_32, %c0_33] : memref<16x128xf32, #tpu.memory_space<vmem>>, vector<16x128xf32>
      %c0_34 = arith.constant 0 : index
      %c0_35 = arith.constant 0 : index
      %27 = vector.load %arg9[%c0_34, %c0_35] : memref<16x128xf32, #tpu.memory_space<vmem>>, vector<16x128xf32>
      tpu.vector_store %arg9[%c0_34, %c0_35], %26 {strides = array<i32>} : memref<16x128xf32, #tpu.memory_space<vmem>>, vector<16x128xf32>,
      %c0_36 = arith.constant 0 : index
      %c0_37 = arith.constant 0 : index
      %28 = vector.load %arg13[%c0_36, %c0_37] : memref<16x128xf32, #tpu.memory_space<vmem>>, vector<16x128xf32>
      %c0_38 = arith.constant 0 : index
      %c0_39 = arith.constant 0 : index
      %29 = vector.load %arg10[%c0_38, %c0_39] : memref<16x128xf32, #tpu.memory_space<vmem>>, vector<16x128xf32>
      tpu.vector_store %arg10[%c0_38, %c0_39], %28 {strides = array<i32>} : memref<16x128xf32, #tpu.memory_space<vmem>>, vector<16x128xf32>,
    } else {
    }
    return
  }
  func.func @transform_0(%arg0: i32, %arg1: i32) -> (i32, i32) {
    %c0_i32 = arith.constant 0 : i32
    return %arg0, %arg1 : i32, i32
  }
  func.func @transform_1(%arg0: i32, %arg1: i32) -> (i32, i32) {
    %c0_i32 = arith.constant 0 : i32
    return %arg0, %arg1 : i32, i32
  }
  func.func @transform_2(%arg0: i32, %arg1: i32) -> (i32, i32) {
    %c0_i32 = arith.constant 0 : i32
    return %arg0, %arg1 : i32, i32
  }
  func.func @transform_3(%arg0: i32, %arg1: i32) -> (i32, i32) {
    %c0_i32 = arith.constant 0 : i32
    %c0_i32_0 = arith.constant 0 : i32
    return %arg1, %c0_i32 : i32, i32
  }
  func.func @transform_4(%arg0: i32, %arg1: i32) -> (i32, i32) {
    %c0_i32 = arith.constant 0 : i32
    %c0_i32_0 = arith.constant 0 : i32
    return %arg1, %c0_i32 : i32, i32
  }
  func.func @transform_5(%arg0: i32, %arg1: i32) -> (i32, i32) {
    %c0_i32 = arith.constant 0 : i32
    %c0_i32_0 = arith.constant 0 : i32
    return %arg1, %c0_i32 : i32, i32
  }
  func.func @transform_6(%arg0: i32, %arg1: i32) -> (i32, i32) {
    %c0_i32 = arith.constant 0 : i32
    %c0_i32_0 = arith.constant 0 : i32
    return %arg0, %c0_i32 : i32, i32
  }
  func.func @transform_7(%arg0: i32, %arg1: i32) -> (i32, i32) {
    %c0_i32 = arith.constant 0 : i32
    %c0_i32_0 = arith.constant 0 : i32
    return %arg0, %c0_i32 : i32, i32
  }
  func.func @transform_8(%arg0: i32, %arg1: i32) -> (i32, i32) {
    %c0_i32 = arith.constant 0 : i32
    %c0_i32_0 = arith.constant 0 : i32
    return %arg0, %c0_i32 : i32, i32
  }
}

</mosaic_0001>

<llo_original>
// kernel: tpu_custom_call.1
$region0: #{tpu_custom_call.1}
  #allocation0 [shape = 'u32[]', space=smem, size = 0x4, offset = 0x4, fixed_abs, tag = 'smem constant byte address 0x4 - core index']
  #allocation1 [shape = 'u32[144,128]{1,0:T(1,128)}', space=vmem, size = 0x12000, scoped, tag = 'internal scratch']
  #allocation2 [shape = 'f32[16,128]{1,0:T(8,128)}', space=vmem, size = 0x2000, scoped, tag = 'scratch operand']
  #allocation3 [shape = 'f32[16,128]{1,0:T(8,128)}', space=vmem, size = 0x2000, scoped, tag = 'scratch operand']
  #allocation4 [shape = 'f32[16,128]{1,0:T(8,128)}', space=vmem, size = 0x2000, scoped, tag = 'scratch operand']
  %s0 = inlined_call_operand.hbm [shape: f32[16,32], index: 0, kind: input, shape index: {}]
  %s1 = inlined_call_operand.hbm [shape: f32[16,32], index: 1, kind: input, shape index: {}]
  %s2 = inlined_call_operand.hbm [shape: f32[16,32], index: 2, kind: input, shape index: {}]
  %s3 = inlined_call_operand.hbm [shape: f32[32,128], index: 3, kind: input, shape index: {}]
  %s4 = inlined_call_operand.hbm [shape: f32[32,128], index: 4, kind: input, shape index: {}]
  %s5 = inlined_call_operand.hbm [shape: f32[32,128], index: 5, kind: input, shape index: {}]
  %s6 = inlined_call_operand.hbm [shape: f32[16,128], index: 6, kind: output, shape index: {0}]
  %s7 = inlined_call_operand.hbm [shape: f32[16,128], index: 7, kind: output, shape index: {1}]
  %s8 = inlined_call_operand.hbm [shape: f32[16,128], index: 8, kind: output, shape index: {2}]
  %9 = xla_tuple %s6, %s7, %s8
  %s10 = sld [smem:[#allocation0]]
  $region82: #{tpu_custom_call.1} parent=0
    _
  %s12 = ssub.s32 1, %s10
  %s13 = scalar_select 0, %s12, %s10
  $region1: #{tpu_custom_call.1} parent=0
    #allocation5 [shape = 'u8[8192]{0}', space=vmem, size = 0x2000, scoped, tag = 'input window, operand 0, single buffered']
    #allocation6 [shape = 's32[1]{0}', space=sflag, size = 0x4, scoped, tag = 'scoped memory for tpu_custom_call.1']
    #allocation7 [shape = 's32[1]{0}', space=sflag, size = 0x4, scoped, tag = 'scoped memory for tpu_custom_call.1']
    #allocation8 [shape = 'u8[8192]{0}', space=vmem, size = 0x2000, scoped, tag = 'input window, operand 1, single buffered']
    #allocation9 [shape = 's32[1]{0}', space=sflag, size = 0x4, scoped, tag = 'scoped memory for tpu_custom_call.1']
    #allocation10 [shape = 'u8[8192]{0}', space=vmem, size = 0x2000, scoped, tag = 'input window, operand 2, single buffered']
    #allocation11 [shape = 'u8[16384]{0}', space=vmem, size = 0x4000, scoped, tag = 'input window, operand 3, single buffered']
    #allocation12 [shape = 's32[1]{0}', space=sflag, size = 0x4, scoped, tag = 'scoped memory for tpu_custom_call.1']
    #allocation13 [shape = 'u8[16384]{0}', space=vmem, size = 0x4000, scoped, tag = 'input window, operand 4, single buffered']
    #allocation14 [shape = 'u8[16384]{0}', space=vmem, size = 0x4000, scoped, tag = 'input window, operand 5, single buffered']
    #allocation15 [shape = 's32[1]{0}', space=sflag, size = 0x4, scoped, tag = 'scoped memory for tpu_custom_call.1']
    #allocation16 [shape = 'u8[8192]{0}', space=vmem, size = 0x2000, scoped, tag = 'output window, operand 0, single buffered']
    #allocation17 [shape = 'u8[8192]{0}', space=vmem, size = 0x2000, scoped, tag = 'output window, operand 1, single buffered']
    #allocation18 [shape = 's32[1]{0}', space=sflag, size = 0x4, scoped, tag = 'scoped memory for tpu_custom_call.1']
    #allocation19 [shape = 'u8[8192]{0}', space=vmem, size = 0x2000, scoped, tag = 'output window, operand 2, single buffered']
    %14 = vsyncpa [#allocation6], 0
    %15 = vsyncpa [#allocation9], 0
    %16 = vsyncpa [#allocation12], 0
    %17 = vsyncpa [#allocation15], 0
    %18 = vsyncpa [#allocation7], 0
    %19 = vsyncpa [#allocation18], 0
    // Predicated region
    $region2: #{tpu_custom_call.1} parent=1 // pred_check
      _
    $region3: #{tpu_custom_call.1} parent=1 // pred_check_branch
      %21 = sbr.rel (0) target = $region5
    $region4: #{tpu_custom_call.1} parent=1 // pred_region
      %s23 = ssub.s32 256, 256
      %24 = vsyncadd [#allocation6], %s23
      %s25 = sshll.u32 [#allocation5], 4
      %s26 = int_to_ptr.vmem [resolvable:$true] %s25
      %31 = dma.hbm_to_vmem [thread:$0]  %s0, 256, %s26, [#allocation6], 128, 128, 8
    $region5: #{tpu_custom_call.1} parent=1 // pred_fallthru
      _
    // Predicated region
    $region6: #{tpu_custom_call.1} parent=1 // pred_check
      _
    $region7: #{tpu_custom_call.1} parent=1 // pred_check_branch
      %33 = sbr.rel (0) target = $region9
    $region8: #{tpu_custom_call.1} parent=1 // pred_region
      %s35 = ssub.s32 256, 256
      %36 = vsyncadd [#allocation9], %s35
      %s37 = sshll.u32 [#allocation8], 4
      %s38 = int_to_ptr.vmem [resolvable:$true] %s37
      %43 = dma.hbm_to_vmem [thread:$0]  %s1, 256, %s38, [#allocation9], 128, 128, 8
    $region9: #{tpu_custom_call.1} parent=1 // pred_fallthru
      _
    // Predicated region
    $region10: #{tpu_custom_call.1} parent=1 // pred_check
      _
    $region11: #{tpu_custom_call.1} parent=1 // pred_check_branch
      %45 = sbr.rel (0) target = $region13
    $region12: #{tpu_custom_call.1} parent=1 // pred_region
      %s47 = ssub.s32 256, 256
      %48 = vsyncadd [#allocation9], %s47
      %s49 = sshll.u32 [#allocation10], 4
      %s50 = int_to_ptr.vmem [resolvable:$true] %s49
      %55 = dma.hbm_to_vmem [thread:$0]  %s2, 256, %s50, [#allocation9], 128, 128, 8
    $region13: #{tpu_custom_call.1} parent=1 // pred_fallthru
      _
    // Predicated region
    $region14: #{tpu_custom_call.1} parent=1 // pred_check
      _
    $region15: #{tpu_custom_call.1} parent=1 // pred_check_branch
      %57 = sbr.rel (0) target = $region17
    $region16: #{tpu_custom_call.1} parent=1 // pred_region
      %s59 = ssub.s32 512, 512
      %60 = vsyncadd [#allocation12], %s59
      %s61 = sshll.u32 [#allocation11], 4
      %s62 = int_to_ptr.vmem [resolvable:$true] %s61
      %67 = dma.hbm_to_vmem [thread:$0]  %s3, 512, %s62, [#allocation12], 128, 128, 8
    $region17: #{tpu_custom_call.1} parent=1 // pred_fallthru
      _
    // Predicated region
    $region18: #{tpu_custom_call.1} parent=1 // pred_check
      _
    $region19: #{tpu_custom_call.1} parent=1 // pred_check_branch
      %69 = sbr.rel (0) target = $region21
    $region20: #{tpu_custom_call.1} parent=1 // pred_region
      %s71 = ssub.s32 512, 512
      %72 = vsyncadd [#allocation12], %s71
      %s73 = sshll.u32 [#allocation13], 4
      %s74 = int_to_ptr.vmem [resolvable:$true] %s73
      %79 = dma.hbm_to_vmem [thread:$0]  %s4, 512, %s74, [#allocation12], 128, 128, 8
    $region21: #{tpu_custom_call.1} parent=1 // pred_fallthru
      _
    // Predicated region
    $region22: #{tpu_custom_call.1} parent=1 // pred_check
      _
    $region23: #{tpu_custom_call.1} parent=1 // pred_check_branch
      %81 = sbr.rel (0) target = $region25
    $region24: #{tpu_custom_call.1} parent=1 // pred_region
      %s83 = ssub.s32 512, 512
      %84 = vsyncadd [#allocation15], %s83
      %s85 = sshll.u32 [#allocation14], 4
      %s86 = int_to_ptr.vmem [resolvable:$true] %s85
      %91 = dma.hbm_to_vmem [thread:$0]  %s5, 512, %s86, [#allocation15], 128, 128, 8
    $region25: #{tpu_custom_call.1} parent=1 // pred_fallthru
      _
    // Predicated region
    $region26: #{tpu_custom_call.1} parent=1 // pred_check
      _
    $region27: #{tpu_custom_call.1} parent=1 // pred_check_branch
      %93 = sbr.rel (0) target = $region29
    $region28: #{tpu_custom_call.1} parent=1 // pred_region
      %94 = dma.done [#allocation6], 256
    $region29: #{tpu_custom_call.1} parent=1 // pred_fallthru
      _
    // Predicated region
    $region30: #{tpu_custom_call.1} parent=1 // pred_check
      _
    $region31: #{tpu_custom_call.1} parent=1 // pred_check_branch
      %96 = sbr.rel (0) target = $region33
    $region32: #{tpu_custom_call.1} parent=1 // pred_region
      %97 = dma.done [#allocation9], 256
    $region33: #{tpu_custom_call.1} parent=1 // pred_fallthru
      _
    // Predicated region
    $region34: #{tpu_custom_call.1} parent=1 // pred_check
      _
    $region35: #{tpu_custom_call.1} parent=1 // pred_check_branch
      %99 = sbr.rel (0) target = $region37
    $region36: #{tpu_custom_call.1} parent=1 // pred_region
      %100 = dma.done [#allocation9], 256
    $region37: #{tpu_custom_call.1} parent=1 // pred_fallthru
      _
    // Predicated region
    $region38: #{tpu_custom_call.1} parent=1 // pred_check
      _
    $region39: #{tpu_custom_call.1} parent=1 // pred_check_branch
      %102 = sbr.rel (0) target = $region41
    $region40: #{tpu_custom_call.1} parent=1 // pred_region
      %103 = dma.done [#allocation12], 512
    $region41: #{tpu_custom_call.1} parent=1 // pred_fallthru
      _
    // Predicated region
    $region42: #{tpu_custom_call.1} parent=1 // pred_check
      _
    $region43: #{tpu_custom_call.1} parent=1 // pred_check_branch
      %105 = sbr.rel (0) target = $region45
    $region44: #{tpu_custom_call.1} parent=1 // pred_region
      %106 = dma.done [#allocation12], 512
    $region45: #{tpu_custom_call.1} parent=1 // pred_fallthru
      _
    // Predicated region
    $region46: #{tpu_custom_call.1} parent=1 // pred_check
      _
    $region47: #{tpu_custom_call.1} parent=1 // pred_check_branch
      %108 = sbr.rel (0) target = $region49
    $region48: #{tpu_custom_call.1} parent=1 // pred_region
      %109 = dma.done [#allocation15], 512
    $region49: #{tpu_custom_call.1} parent=1 // pred_fallthru
      _
    %p110 = scmp.eq.s32.totalorder 0, 0
    // Predicated region
    $region50: #{tpu_custom_call.1} parent=1 // pred_check
      %p111 = pneg %p110
    $region51: #{tpu_custom_call.1} parent=1 // pred_check_branch
      %113 = sbr.rel (%p111) target = $region53
    $region52: #{tpu_custom_call.1} parent=1 // pred_region
      %114 = vst [vmem:[#allocation2] sm:$0xff] 0.0
      %115 = vst [vmem:[#allocation2 + $0x8] sm:$0xff] 0.0
      %116 = vst [vmem:[#allocation3] sm:$0xff] 0.0
      %117 = vst [vmem:[#allocation3 + $0x8] sm:$0xff] 0.0
      %118 = vst [vmem:[#allocation4] sm:$0xff] 0.0
      %119 = vst [vmem:[#allocation4 + $0x8] sm:$0xff] 0.0
    $region53: #{tpu_custom_call.1} parent=1 // pred_fallthru
      _
    %v120 = vld [vmem:[#allocation2] sm:$0xff]
    %v121 = vld [vmem:[#allocation2 + $0x8] sm:$0xff]
    %v122 = vld [vmem:[#allocation5] sm:$0xff]
    %v123 = vld [vmem:[#allocation5 + $0x8] sm:$0xff]
    %v124 = vld [vmem:[#allocation11] sm:$0xff]
    %v125 = vld [vmem:[#allocation11 + $0x8] sm:$0xff]
    %v126 = vld [vmem:[#allocation11 + $0x10] sm:$0xff]
    %v127 = vld [vmem:[#allocation11 + $0x18] sm:$0xff]
    %vm128 = vcmask 261120
    %v130 = vsel %vm128, %v122, 0
    %v133 = vsel %vm128, %v123, 0
    %135 = vmatprep.subr.mxu0 0.0
    %136 = vmatpush1.msra.mxu0 %v124
    %137 = vmatprep.subr.mxu0 0.0
    %138 = vmatpush1.msra.mxu0 %v125
    %139 = vmatprep.subr.mxu0 0.0
    %140 = vmatpush1.msra.mxu0 %v126
    %141 = vmatprep.subr.mxu0 0.0
    %142 = vmatpush1.msra.mxu0 %v127
    %143 = vmatprep.subr.mxu0 0.0
    %144 = vmatpush1.msra.mxu0 0.0
    %145 = vmatprep.subr.mxu0 0.0
    %146 = vmatpush1.msra.mxu0 0.0
    %147 = vmatprep.subr.mxu0 0.0
    %148 = vmatpush1.msra.mxu0 0.0
    %149 = vmatprep.subr.mxu0 0.0
    %150 = vmatpush1.msra.mxu0 0.0
    %151 = vmatprep.subr.mxu0 0.0
    %152 = vmatpush1.msra.mxu0 0.0
    %153 = vmatprep.subr.mxu0 0.0
    %154 = vmatpush1.msra.mxu0 0.0
    %155 = vmatprep.subr.mxu0 0.0
    %156 = vmatpush1.msra.mxu0 0.0
    %157 = vmatprep.subr.mxu0 0.0
    %158 = vmatpush1.msra.mxu0 0.0
    %159 = vmatprep.subr.mxu0 0.0
    %160 = vmatpush1.msra.mxu0 0.0
    %161 = vmatprep.subr.mxu0 0.0
    %162 = vmatpush1.msra.mxu0 0.0
    %163 = vmatprep.subr.mxu0 0.0
    %164 = vmatpush1.msra.mxu0 0.0
    %165 = vmatprep.subr.mxu0 0.0
    %166 = vmatpush1.msra.mxu0 0.0
    %167 = vmatprep.subr.mxu0 0.0
    %168 = vmatpush1.msra.mxu0 0.0
    %169 = vmatprep.subr.mxu0 0.0
    %170 = vmatpush1.msra.mxu0 0.0
    %171 = vmatprep.subr.mxu0 0.0
    %172 = vmatpush1.msra.mxu0 0.0
    %173 = vmatprep.subr.mxu0 0.0
    %174 = vmatpush1.msra.mxu0 0.0
    %175 = vmatprep.subr.mxu0 0.0
    %176 = vmatpush1.msra.mxu0 0.0
    %177 = vmatprep.subr.mxu0 0.0
    %178 = vmatpush1.msra.mxu0 0.0
    %179 = vmatprep.subr.mxu0 0.0
    %180 = vmatpush1.msra.mxu0 0.0
    %181 = vmatprep.subr.mxu0 0.0
    %182 = vmatpush1.msra.mxu0 0.0
    %183 = vmatprep.subr.mxu0 0.0
    %184 = vmatpush1.msra.mxu0 0.0
    %185 = vmatprep.subr.mxu0 0.0
    %186 = vmatpush1.msra.mxu0 0.0
    %187 = vmatprep.subr.mxu0 0.0
    %188 = vmatpush1.msra.mxu0 0.0
    %189 = vmatprep.subr.mxu0 0.0
    %190 = vmatpush1.msra.mxu0 0.0
    %191 = vmatprep.subr.mxu0 0.0
    %192 = vmatpush1.msra.mxu0 0.0
    %193 = vmatprep.subr.mxu0 0.0
    %194 = vmatpush1.msra.mxu0 0.0
    %195 = vmatprep.subr.mxu0 0.0
    %196 = vmatpush1.msra.mxu0 0.0
    %197 = vmatprep.subr.mxu0 0.0
    %198 = vmatpush1.msra.mxu0 0.0
    %199 = vmatprep.mubr.f32.mxu0 0.0
    %200 = vmatmul.mubr.f32.gmra.mrb[0].mxu0 %v130
    %v201 = vpop.f32.mrb[0].mxu0
    %v202 = vadd.f32 0.0, %v201
    %v203 = vpop.f32.mrb[0].mxu0
    %204 = vmatprep.mubr.f32.mxu0 0.0
    %205 = vmatmul.mubr.f32.gmra.mrb[0].mxu0 %v133
    %v206 = vpop.f32.mrb[0].mxu0
    %v207 = vadd.f32 0.0, %v206
    %v208 = vpop.f32.mrb[0].mxu0
    %209 = vdwg.mxu0
    %v210 = vadd.f32 %v120, %v202
    %v211 = vadd.f32 %v121, %v207
    %212 = vst [vmem:[#allocation2] sm:$0xff] %v210
    %213 = vst [vmem:[#allocation2 + $0x8] sm:$0xff] %v211
    %v214 = vld [vmem:[#allocation3] sm:$0xff]
    %v215 = vld [vmem:[#allocation3 + $0x8] sm:$0xff]
    %v216 = vld [vmem:[#allocation8] sm:$0xff]
    %v217 = vld [vmem:[#allocation8 + $0x8] sm:$0xff]
    %v218 = vld [vmem:[#allocation13] sm:$0xff]
    %v219 = vld [vmem:[#allocation13 + $0x8] sm:$0xff]
    %v220 = vld [vmem:[#allocation13 + $0x10] sm:$0xff]
    %v221 = vld [vmem:[#allocation13 + $0x18] sm:$0xff]
    %v223 = vsel %vm128, %v216, 0
    %v226 = vsel %vm128, %v217, 0
    %228 = vmatprep.subr.mxu0 0.0
    %229 = vmatpush1.msra.mxu0 %v218
    %230 = vmatprep.subr.mxu0 0.0
    %231 = vmatpush1.msra.mxu0 %v219
    %232 = vmatprep.subr.mxu0 0.0
    %233 = vmatpush1.msra.mxu0 %v220
    %234 = vmatprep.subr.mxu0 0.0
    %235 = vmatpush1.msra.mxu0 %v221
    %236 = vmatprep.subr.mxu0 0.0
    %237 = vmatpush1.msra.mxu0 0.0
    %238 = vmatprep.subr.mxu0 0.0
    %239 = vmatpush1.msra.mxu0 0.0
    %240 = vmatprep.subr.mxu0 0.0
    %241 = vmatpush1.msra.mxu0 0.0
    %242 = vmatprep.subr.mxu0 0.0
    %243 = vmatpush1.msra.mxu0 0.0
    %244 = vmatprep.subr.mxu0 0.0
    %245 = vmatpush1.msra.mxu0 0.0
    %246 = vmatprep.subr.mxu0 0.0
    %247 = vmatpush1.msra.mxu0 0.0
    %248 = vmatprep.subr.mxu0 0.0
    %249 = vmatpush1.msra.mxu0 0.0
    %250 = vmatprep.subr.mxu0 0.0
    %251 = vmatpush1.msra.mxu0 0.0
    %252 = vmatprep.subr.mxu0 0.0
    %253 = vmatpush1.msra.mxu0 0.0
    %254 = vmatprep.subr.mxu0 0.0
    %255 = vmatpush1.msra.mxu0 0.0
    %256 = vmatprep.subr.mxu0 0.0
    %257 = vmatpush1.msra.mxu0 0.0
    %258 = vmatprep.subr.mxu0 0.0
    %259 = vmatpush1.msra.mxu0 0.0
    %260 = vmatprep.subr.mxu0 0.0
    %261 = vmatpush1.msra.mxu0 0.0
    %262 = vmatprep.subr.mxu0 0.0
    %263 = vmatpush1.msra.mxu0 0.0
    %264 = vmatprep.subr.mxu0 0.0
    %265 = vmatpush1.msra.mxu0 0.0
    %266 = vmatprep.subr.mxu0 0.0
    %267 = vmatpush1.msra.mxu0 0.0
    %268 = vmatprep.subr.mxu0 0.0
    %269 = vmatpush1.msra.mxu0 0.0
    %270 = vmatprep.subr.mxu0 0.0
    %271 = vmatpush1.msra.mxu0 0.0
    %272 = vmatprep.subr.mxu0 0.0
    %273 = vmatpush1.msra.mxu0 0.0
    %274 = vmatprep.subr.mxu0 0.0
    %275 = vmatpush1.msra.mxu0 0.0
    %276 = vmatprep.subr.mxu0 0.0
    %277 = vmatpush1.msra.mxu0 0.0
    %278 = vmatprep.subr.mxu0 0.0
    %279 = vmatpush1.msra.mxu0 0.0
    %280 = vmatprep.subr.mxu0 0.0
    %281 = vmatpush1.msra.mxu0 0.0
    %282 = vmatprep.subr.mxu0 0.0
    %283 = vmatpush1.msra.mxu0 0.0
    %284 = vmatprep.subr.mxu0 0.0
    %285 = vmatpush1.msra.mxu0 0.0
    %286 = vmatprep.subr.mxu0 0.0
    %287 = vmatpush1.msra.mxu0 0.0
    %288 = vmatprep.subr.mxu0 0.0
    %289 = vmatpush1.msra.mxu0 0.0
    %290 = vmatprep.subr.mxu0 0.0
    %291 = vmatpush1.msra.mxu0 0.0
    %292 = vmatprep.mubr.f32.mxu0 0.0
    %293 = vmatmul.mubr.f32.gmra.mrb[0].mxu0 %v223
    %v294 = vpop.f32.mrb[0].mxu0
    %v295 = vadd.f32 0.0, %v294
    %v296 = vpop.f32.mrb[0].mxu0
    %297 = vmatprep.mubr.f32.mxu0 0.0
    %298 = vmatmul.mubr.f32.gmra.mrb[0].mxu0 %v226
    %v299 = vpop.f32.mrb[0].mxu0
    %v300 = vadd.f32 0.0, %v299
    %v301 = vpop.f32.mrb[0].mxu0
    %302 = vdwg.mxu0
    %v303 = vadd.f32 %v214, %v295
    %v304 = vadd.f32 %v215, %v300
    %305 = vst [vmem:[#allocation3] sm:$0xff] %v303
    %306 = vst [vmem:[#allocation3 + $0x8] sm:$0xff] %v304
    %v307 = vld [vmem:[#allocation4] sm:$0xff]
    %v308 = vld [vmem:[#allocation4 + $0x8] sm:$0xff]
    %v309 = vld [vmem:[#allocation10] sm:$0xff]
    %v310 = vld [vmem:[#allocation10 + $0x8] sm:$0xff]
    %v311 = vld [vmem:[#allocation14] sm:$0xff]
    %v312 = vld [vmem:[#allocation14 + $0x8] sm:$0xff]
    %v313 = vld [vmem:[#allocation14 + $0x10] sm:$0xff]
    %v314 = vld [vmem:[#allocation14 + $0x18] sm:$0xff]
    %v316 = vsel %vm128, %v309, 0
    %v319 = vsel %vm128, %v310, 0
    %321 = vmatprep.subr.mxu0 0.0
    %322 = vmatpush1.msra.mxu0 %v311
    %323 = vmatprep.subr.mxu0 0.0
    %324 = vmatpush1.msra.mxu0 %v312
    %325 = vmatprep.subr.mxu0 0.0
    %326 = vmatpush1.msra.mxu0 %v313
    %327 = vmatprep.subr.mxu0 0.0
    %328 = vmatpush1.msra.mxu0 %v314
    %329 = vmatprep.subr.mxu0 0.0
    %330 = vmatpush1.msra.mxu0 0.0
    %331 = vmatprep.subr.mxu0 0.0
    %332 = vmatpush1.msra.mxu0 0.0
    %333 = vmatprep.subr.mxu0 0.0
    %334 = vmatpush1.msra.mxu0 0.0
    %335 = vmatprep.subr.mxu0 0.0
    %336 = vmatpush1.msra.mxu0 0.0
    %337 = vmatprep.subr.mxu0 0.0
    %338 = vmatpush1.msra.mxu0 0.0
    %339 = vmatprep.subr.mxu0 0.0
    %340 = vmatpush1.msra.mxu0 0.0
    %341 = vmatprep.subr.mxu0 0.0
    %342 = vmatpush1.msra.mxu0 0.0
    %343 = vmatprep.subr.mxu0 0.0
    %344 = vmatpush1.msra.mxu0 0.0
    %345 = vmatprep.subr.mxu0 0.0
    %346 = vmatpush1.msra.mxu0 0.0
    %347 = vmatprep.subr.mxu0 0.0
    %348 = vmatpush1.msra.mxu0 0.0
    %349 = vmatprep.subr.mxu0 0.0
    %350 = vmatpush1.msra.mxu0 0.0
    %351 = vmatprep.subr.mxu0 0.0
    %352 = vmatpush1.msra.mxu0 0.0
    %353 = vmatprep.subr.mxu0 0.0
    %354 = vmatpush1.msra.mxu0 0.0
    %355 = vmatprep.subr.mxu0 0.0
    %356 = vmatpush1.msra.mxu0 0.0
    %357 = vmatprep.subr.mxu0 0.0
    %358 = vmatpush1.msra.mxu0 0.0
    %359 = vmatprep.subr.mxu0 0.0
    %360 = vmatpush1.msra.mxu0 0.0
    %361 = vmatprep.subr.mxu0 0.0
    %362 = vmatpush1.msra.mxu0 0.0
    %363 = vmatprep.subr.mxu0 0.0
    %364 = vmatpush1.msra.mxu0 0.0
    %365 = vmatprep.subr.mxu0 0.0
    %366 = vmatpush1.msra.mxu0 0.0
    %367 = vmatprep.subr.mxu0 0.0
    %368 = vmatpush1.msra.mxu0 0.0
    %369 = vmatprep.subr.mxu0 0.0
    %370 = vmatpush1.msra.mxu0 0.0
    %371 = vmatprep.subr.mxu0 0.0
    %372 = vmatpush1.msra.mxu0 0.0
    %373 = vmatprep.subr.mxu0 0.0
    %374 = vmatpush1.msra.mxu0 0.0
    %375 = vmatprep.subr.mxu0 0.0
    %376 = vmatpush1.msra.mxu0 0.0
    %377 = vmatprep.subr.mxu0 0.0
    %378 = vmatpush1.msra.mxu0 0.0
    %379 = vmatprep.subr.mxu0 0.0
    %380 = vmatpush1.msra.mxu0 0.0
    %381 = vmatprep.subr.mxu0 0.0
    %382 = vmatpush1.msra.mxu0 0.0
    %383 = vmatprep.subr.mxu0 0.0
    %384 = vmatpush1.msra.mxu0 0.0
    %385 = vmatprep.mubr.f32.mxu0 0.0
    %386 = vmatmul.mubr.f32.gmra.mrb[0].mxu0 %v316
    %v387 = vpop.f32.mrb[0].mxu0
    %v388 = vadd.f32 0.0, %v387
    %v389 = vpop.f32.mrb[0].mxu0
    %390 = vmatprep.mubr.f32.mxu0 0.0
    %391 = vmatmul.mubr.f32.gmra.mrb[0].mxu0 %v319
    %v392 = vpop.f32.mrb[0].mxu0
    %v393 = vadd.f32 0.0, %v392
    %v394 = vpop.f32.mrb[0].mxu0
    %395 = vdwg.mxu0
    %v396 = vadd.f32 %v307, %v388
    %v397 = vadd.f32 %v308, %v393
    %398 = vst [vmem:[#allocation4] sm:$0xff] %v396
    %399 = vst [vmem:[#allocation4 + $0x8] sm:$0xff] %v397
    // Predicated region
    $region54: #{tpu_custom_call.1} parent=1 // pred_check
      %p400 = pneg %p110
    $region55: #{tpu_custom_call.1} parent=1 // pred_check_branch
      %402 = sbr.rel (%p400) target = $region57
    $region56: #{tpu_custom_call.1} parent=1 // pred_region
      %v403 = vld [vmem:[#allocation2] sm:$0xff]
      %v404 = vld [vmem:[#allocation2 + $0x8] sm:$0xff]
      %405 = vst [vmem:[#allocation16] sm:$0xff] %v403
      %406 = vst [vmem:[#allocation16 + $0x8] sm:$0xff] %v404
      %v407 = vld [vmem:[#allocation3] sm:$0xff]
      %v408 = vld [vmem:[#allocation3 + $0x8] sm:$0xff]
      %409 = vst [vmem:[#allocation17] sm:$0xff] %v407
      %410 = vst [vmem:[#allocation17 + $0x8] sm:$0xff] %v408
      %v411 = vld [vmem:[#allocation4] sm:$0xff]
      %v412 = vld [vmem:[#allocation4 + $0x8] sm:$0xff]
      %413 = vst [vmem:[#allocation19] sm:$0xff] %v411
      %414 = vst [vmem:[#allocation19 + $0x8] sm:$0xff] %v412
    $region57: #{tpu_custom_call.1} parent=1 // pred_fallthru
      _
    // Predicated region
    $region58: #{tpu_custom_call.1} parent=1 // pred_check
      _
    $region59: #{tpu_custom_call.1} parent=1 // pred_check_branch
      %416 = sbr.rel (0) target = $region61
    $region60: #{tpu_custom_call.1} parent=1 // pred_region
      %s418 = ssub.s32 256, 256
      %419 = vsyncadd [#allocation7], %s418
      %s420 = sshll.u32 [#allocation16], 4
      %s421 = int_to_ptr.vmem [resolvable:$true] %s420
      %426 = dma.vmem_to_hbm [thread:$0]  %s421, 256, %s6, [#allocation7], 128, 128, 8
    $region61: #{tpu_custom_call.1} parent=1 // pred_fallthru
      _
    // Predicated region
    $region62: #{tpu_custom_call.1} parent=1 // pred_check
      _
    $region63: #{tpu_custom_call.1} parent=1 // pred_check_branch
      %428 = sbr.rel (0) target = $region65
    $region64: #{tpu_custom_call.1} parent=1 // pred_region
      %s430 = ssub.s32 256, 256
      %431 = vsyncadd [#allocation18], %s430
      %s432 = sshll.u32 [#allocation17], 4
      %s433 = int_to_ptr.vmem [resolvable:$true] %s432
      %438 = dma.vmem_to_hbm [thread:$0]  %s433, 256, %s7, [#allocation18], 128, 128, 8
    $region65: #{tpu_custom_call.1} parent=1 // pred_fallthru
      _
    // Predicated region
    $region66: #{tpu_custom_call.1} parent=1 // pred_check
      _
    $region67: #{tpu_custom_call.1} parent=1 // pred_check_branch
      %440 = sbr.rel (0) target = $region69
    $region68: #{tpu_custom_call.1} parent=1 // pred_region
      %s442 = ssub.s32 256, 256
      %443 = vsyncadd [#allocation18], %s442
      %s444 = sshll.u32 [#allocation19], 4
      %s445 = int_to_ptr.vmem [resolvable:$true] %s444
      %450 = dma.vmem_to_hbm [thread:$0]  %s445, 256, %s8, [#allocation18], 128, 128, 8
    $region69: #{tpu_custom_call.1} parent=1 // pred_fallthru
      _
    // Predicated region
    $region70: #{tpu_custom_call.1} parent=1 // pred_check
      _
    $region71: #{tpu_custom_call.1} parent=1 // pred_check_branch
      %452 = sbr.rel (0) target = $region73
    $region72: #{tpu_custom_call.1} parent=1 // pred_region
      %453 = dma.done [#allocation7], 256
    $region73: #{tpu_custom_call.1} parent=1 // pred_fallthru
      _
    // Predicated region
    $region74: #{tpu_custom_call.1} parent=1 // pred_check
      _
    $region75: #{tpu_custom_call.1} parent=1 // pred_check_branch
      %455 = sbr.rel (0) target = $region77
    $region76: #{tpu_custom_call.1} parent=1 // pred_region
      %456 = dma.done [#allocation18], 256
    $region77: #{tpu_custom_call.1} parent=1 // pred_fallthru
      _
    // Predicated region
    $region78: #{tpu_custom_call.1} parent=1 // pred_check
      _
    $region79: #{tpu_custom_call.1} parent=1 // pred_check_branch
      %458 = sbr.rel (0) target = $region81
    $region80: #{tpu_custom_call.1} parent=1 // pred_region
      %459 = dma.done [#allocation18], 256
    $region81: #{tpu_custom_call.1} parent=1 // pred_fallthru
      _
    %460 = vsyncpa [#allocation6], 1
    %461 = vsyncpa [#allocation9], 1
    %462 = vsyncpa [#allocation12], 1
    %463 = vsyncpa [#allocation15], 1
    %464 = vsyncpa [#allocation7], 1
    %465 = vsyncpa [#allocation18], 1

</llo_original>
